<compile_context>
chip_gen: v7x
topology: tpu7x:2x2x1
jax: 0.10.0
libtpu: 0.0.40
codegen_flags: <defaults>
</compile_context>

<pallas_src>
import functools

import jax
import jax.numpy as jnp
from jax import lax
from jax.experimental import pallas as pl
from jax.experimental.pallas import tpu as pltpu


# ----------------------------------------------------------------------------- #
# Kernels
# ----------------------------------------------------------------------------- #
def _shortcut_core(x_ref, *, w_out):
    """x_ref: (bN, C, H_out, 2W) view where row k holds input rows 2k and 2k+1
    concatenated along W.  Returns the option-A shortcut body (even rows, even
    columns) as float32 of shape (bN, C, H_out, W_out)."""
    bn, c, h_out, two_w = x_ref.shape
    x2 = x_ref[...].reshape(bn * c * h_out, two_w)       # minor dim unchanged

    # Even-column pick of the first W entries expressed as a 0/1 matmul:
    # sel[q, j] = 1 iff q == 2*j  (exact; single nonzero per column).
    q = lax.broadcasted_iota(jnp.int32, (two_w, w_out), 0)
    j = lax.broadcasted_iota(jnp.int32, (two_w, w_out), 1)
    sel = (q == 2 * j).astype(x2.dtype)

    y = jnp.dot(x2, sel, preferred_element_type=jnp.float32)   # (bN*C*H_out, W_out)
    return y.reshape(bn, c, h_out, w_out)


def _shortcut_kernel(x_ref, o_ref, *, pad, w_out):
    bn, c = x_ref.shape[0], x_ref.shape[1]
    h_out = x_ref.shape[2]
    body = _shortcut_core(x_ref, w_out=w_out).astype(o_ref.dtype)
    o_ref[:, pad:pad + c, :, :] = body
    if pad > 0:  # zero only the pad slices (no full-tile pre-zero + overwrite)
        zeros = jnp.zeros((bn, pad, h_out, w_out), dtype=o_ref.dtype)
        o_ref[:, 0:pad, :, :] = zeros
        o_ref[:, pad + c:, :, :] = zeros


def _residual_add_kernel(y_ref, x_ref, o_ref, *, pad, w_out):
    """Fused consumer: o = y_main + option_A_shortcut(x)."""
    c = x_ref.shape[1]
    body = _shortcut_core(x_ref, w_out=w_out)
    mid = y_ref[:, pad:pad + c, :, :].astype(jnp.float32) + body
    o_ref[:, pad:pad + c, :, :] = mid.astype(o_ref.dtype)
    if pad > 0:  # pad region of the shortcut is zero -> just pass y through
        o_ref[:, 0:pad, :, :] = y_ref[:, 0:pad, :, :]
        o_ref[:, pad + c:, :, :] = y_ref[:, pad + c:, :, :]


# ----------------------------------------------------------------------------- #
# Wrappers
# ----------------------------------------------------------------------------- #
def _geometry(x_shape, planes):
    n, c, h, w = x_shape
    pad = planes // 4
    assert pad >= 0, "channel pad must be non-negative"
    c_out = c + 2 * pad
    # TODO(synk): odd H needs ceil handling; all CIFAR ResNet shapes are even.
    assert h % 2 == 0, "even spatial height assumed"
    h_out = h // 2
    w_out = (w + 1) // 2
    return n, c, h, w, pad, c_out, h_out, w_out


def _pick_block_n(n):
    """Batch chunk size: keep >=2 grid steps (feeds both v7x TensorCores) while
    keeping each block a chunky contiguous DMA."""
    if n <= 1:
        return 1
    target = max(1, min(8, n // 2))
    for bn in range(target, 0, -1):
        if n % bn == 0:
            return bn
    return 1


def lambda_layer_option_a(x_nchw, planes, block_n=None):
    """Pallas implementation of
       lambda x: F.pad(x[:, :, ::2, ::2],
                       (0, 0, 0, 0, planes // 4, planes // 4), 'constant', 0)
       with x in NCHW (PyTorch convention)."""
    n, c, h, w, pad, c_out, h_out, w_out = _geometry(x_nchw.shape, planes)
    bn = block_n or _pick_block_n(n)
    assert n % bn == 0

    # Free (metadata-only) view; no transpose, no extra HBM traffic.
    x_view = x_nchw.reshape(n, c, h_out, 2 * w)

    itemsize = jnp.dtype(x_nchw.dtype).itemsize
    cost = pl.CostEstimate(
        flops=2 * n * c * h_out * (2 * w) * w_out,
        transcendentals=0,
        bytes_accessed=(n * c * h * w + n * c_out * h_out * w_out) * itemsize)

    return pl.pallas_call(
        functools.partial(_shortcut_kernel, pad=pad, w_out=w_out),
        out_shape=jax.ShapeDtypeStruct((n, c_out, h_out, w_out), x_nchw.dtype),
        grid=(n // bn,),
        in_specs=[pl.BlockSpec((bn, c, h_out, 2 * w), lambda i: (i, 0, 0, 0))],
        out_specs=pl.BlockSpec((bn, c_out, h_out, w_out), lambda i: (i, 0, 0, 0)),
        compiler_params=pltpu.CompilerParams(dimension_semantics=("parallel",)),
        cost_estimate=cost,
    )(x_view)


def residual_add_option_a(y_main, x_nchw, planes, block_n=None):
    """Fused `y_main + shortcut(x)` (the `out += self.shortcut(x)` consumer),
    avoiding an intermediate shortcut tensor in HBM."""
    n, c, h, w, pad, c_out, h_out, w_out = _geometry(x_nchw.shape, planes)
    assert y_main.shape == (n, c_out, h_out, w_out), (y_main.shape,
                                                      (n, c_out, h_out, w_out))
    bn = block_n or _pick_block_n(n)
    assert n % bn == 0

    x_view = x_nchw.reshape(n, c, h_out, 2 * w)

    itemsize = jnp.dtype(y_main.dtype).itemsize
    cost = pl.CostEstimate(
        flops=2 * n * c * h_out * (2 * w) * w_out + n * c_out * h_out * w_out,
        transcendentals=0,
        bytes_accessed=(n * c * h * w + 2 * n * c_out * h_out * w_out) * itemsize)

    return pl.pallas_call(
        functools.partial(_residual_add_kernel, pad=pad, w_out=w_out),
        out_shape=jax.ShapeDtypeStruct(y_main.shape, y_main.dtype),
        grid=(n // bn,),
        in_specs=[pl.BlockSpec((bn, c_out, h_out, w_out), lambda i: (i, 0, 0, 0)),
                  pl.BlockSpec((bn, c, h_out, 2 * w), lambda i: (i, 0, 0, 0))],
        out_specs=pl.BlockSpec((bn, c_out, h_out, w_out), lambda i: (i, 0, 0, 0)),
        compiler_params=pltpu.CompilerParams(dimension_semantics=("parallel",)),
        cost_estimate=cost,
    )(y_main, x_view)


# ----------------------------------------------------------------------------- #
# Self-test
# ----------------------------------------------------------------------------- #
if __name__ == "__main__":
    key = jax.random.PRNGKey(0)
    k1, k2 = jax.random.split(key)

    # Shapes consistent with the resnet option-A downsampling shortcut:
    # N=2, C_in=4, H=W=16, block doubles the channel count -> planes=8.
    x = jax.random.normal(k1, (2, 4, 16, 16), dtype=jnp.float32)
    planes = 8
    pad = planes // 4

    # Pure-JAX reference of the exact PyTorch lambda semantics.
    ref = x[:, :, ::2, ::2]
    ref = jnp.pad(ref, ((0, 0), (pad, pad), (0, 0), (0, 0)))

    y = jax.block_until_ready(lambda_layer_option_a(x, planes))
    assert y.shape == ref.shape, (y.shape, ref.shape)
    assert y.dtype == x.dtype
    assert bool(jnp.allclose(y, ref)), "standalone shortcut mismatch"

    # Fused consumer: out = main_branch + shortcut(x).
    main_branch = jax.random.normal(k2, ref.shape, dtype=jnp.float32)
    z = jax.block_until_ready(residual_add_option_a(main_branch, x, planes))
    assert bool(jnp.allclose(z, main_branch + ref)), "fused residual-add mismatch"

    print("KERNEL_OK")
</pallas_src>

<mosaic_0001>
module attributes {stable_mosaic.version = 11 : i64} {
  func.func @_shortcut_kernel(%arg0: i32, %arg1: memref<1x4x8x32xf32, #tpu.memory_space<vmem>>, %arg2: memref<1x8x8x8xf32, #tpu.memory_space<vmem>>) attributes {dimension_semantics = [#tpu.dimension_semantics<parallel>], iteration_bounds = array<i64: 2>, scalar_prefetch = 0 : i64, scratch_operands = 0 : i64, tpu.core_type = #tpu.core_type<tc>, window_params = [{transform_indices = @transform_0, window_bounds = array<i64: 1, 4, 8, 32>}, {transform_indices = @transform_1, window_bounds = array<i64: 1, 8, 8, 8>}]} {
    %c0 = arith.constant 0 : index
    %c0_0 = arith.constant 0 : index
    %c0_1 = arith.constant 0 : index
    %c0_2 = arith.constant 0 : index
    %0 = vector.load %arg1[%c0, %c0_0, %c0_1, %c0_2] : memref<1x4x8x32xf32, #tpu.memory_space<vmem>>, vector<1x4x8x32xf32>
    %1 = vector.shape_cast %0 : vector<1x4x8x32xf32> to vector<32x32xf32>
    %2 = tpu.iota {dimensions = array<i32: 0>} : vector<32x8xi32>
    %3 = tpu.iota {dimensions = array<i32: 1>} : vector<32x8xi32>
    %c2_i32 = arith.constant 2 : i32
    %4 = vector.broadcast %c2_i32 : i32 to vector<32x8xi32>
    %5 = arith.muli %4, %3 : vector<32x8xi32>
    %6 = arith.cmpi eq, %2, %5 : vector<32x8xi32>
    %7 = arith.extui %6 : vector<32x8xi1> to vector<32x8xi32>
    %8 = arith.sitofp %7 : vector<32x8xi32> to vector<32x8xf32>
    %cst = arith.constant dense<0.000000e+00> : vector<32x8xf32>
    %9 = tpu.matmul %1, %8, %cst {dimension_numbers = #tpu.dot_dimension_numbers<[1], [0], [0], [1], [0, 0, 1, 1], [], []>} : vector<32x32xf32>, vector<32x8xf32>, vector<32x8xf32> -> vector<32x8xf32>
    %10 = vector.shape_cast %9 : vector<32x8xf32> to vector<1x4x8x8xf32>
    %c0_3 = arith.constant 0 : index
    %c2 = arith.constant 2 : index
    %c0_4 = arith.constant 0 : index
    %c0_5 = arith.constant 0 : index
    %11 = vector.load %arg2[%c0_3, %c2, %c0_4, %c0_5] : memref<1x8x8x8xf32, #tpu.memory_space<vmem>>, vector<1x4x8x8xf32>
    tpu.vector_store %arg2[%c0_3, %c2, %c0_4, %c0_5], %10 {strides = array<i32>} : memref<1x8x8x8xf32, #tpu.memory_space<vmem>>, vector<1x4x8x8xf32>,
    %cst_6 = arith.constant 0.000000e+00 : f32
    %12 = vector.broadcast %cst_6 : f32 to vector<1x2x8x8xf32>
    %c0_7 = arith.constant 0 : index
    %c0_8 = arith.constant 0 : index
    %c0_9 = arith.constant 0 : index
    %c0_10 = arith.constant 0 : index
    %13 = vector.load %arg2[%c0_7, %c0_8, %c0_9, %c0_10] : memref<1x8x8x8xf32, #tpu.memory_space<vmem>>, vector<1x2x8x8xf32>
    tpu.vector_store %arg2[%c0_7, %c0_8, %c0_9, %c0_10], %12 {strides = array<i32>} : memref<1x8x8x8xf32, #tpu.memory_space<vmem>>, vector<1x2x8x8xf32>,
    %c0_11 = arith.constant 0 : index
    %c6 = arith.constant 6 : index
    %c0_12 = arith.constant 0 : index
    %c0_13 = arith.constant 0 : index
    %14 = vector.load %arg2[%c0_11, %c6, %c0_12, %c0_13] : memref<1x8x8x8xf32, #tpu.memory_space<vmem>>, vector<1x2x8x8xf32>
    tpu.vector_store %arg2[%c0_11, %c6, %c0_12, %c0_13], %12 {strides = array<i32>} : memref<1x8x8x8xf32, #tpu.memory_space<vmem>>, vector<1x2x8x8xf32>,
    return
  }
  func.func @transform_0(%arg0: i32) -> (i32, i32, i32, i32) {
    %c0_i32 = arith.constant 0 : i32
    %c0_i32_0 = arith.constant 0 : i32
    %c0_i32_1 = arith.constant 0 : i32
    %c0_i32_2 = arith.constant 0 : i32
    return %arg0, %c0_i32, %c0_i32_0, %c0_i32_1 : i32, i32, i32, i32
  }
  func.func @transform_1(%arg0: i32) -> (i32, i32, i32, i32) {
    %c0_i32 = arith.constant 0 : i32
    %c0_i32_0 = arith.constant 0 : i32
    %c0_i32_1 = arith.constant 0 : i32
    %c0_i32_2 = arith.constant 0 : i32
    return %arg0, %c0_i32, %c0_i32_0, %c0_i32_1 : i32, i32, i32, i32
  }
}

</mosaic_0001>

<llo_original>
// kernel: tpu_custom_call.1
$region0: #{tpu_custom_call.1}
  #allocation0 [shape = 'u32[]', space=smem, size = 0x4, offset = 0x4, fixed_abs, tag = 'smem constant byte address 0x4 - core index']
  #allocation1 [shape = 'u32[144,128]{1,0:T(1,128)}', space=vmem, size = 0x12000, scoped, tag = 'internal scratch']
  %s0 = inlined_call_operand.hbm [shape: f32[2,4,8,32], index: 0, kind: input, shape index: {}]
  %s1 = inlined_call_operand.hbm [shape: f32[2,8,8,8], index: 1, kind: output, shape index: {}]
  %s2 = sld [smem:[#allocation0]]
  $region41: #{tpu_custom_call.1} parent=0
    _
  %s4 = ssub.s32 1, %s2
  %s5 = scalar_select 0, %s4, %s2
  $region1: #{tpu_custom_call.1} parent=0
    #allocation2 [shape = 'u8[32768]{0}', space=vmem, size = 0x8000, scoped, tag = 'input window, operand 0']
    #allocation3 [shape = 's32[2]{0}', space=sflag, size = 0x8, scoped, tag = 'scoped memory for tpu_custom_call.1']
    #allocation4 [shape = 's32[2]{0}', space=sflag, size = 0x8, scoped, tag = 'scoped memory for tpu_custom_call.1']
    #allocation5 [shape = 'u8[65536]{0}', space=vmem, size = 0x10000, scoped, tag = 'output window, operand 0']
    %6 = vsyncpa [#allocation3], 0
    %s7 = scalar_lea.sflag [#allocation3], 1
    %8 = vsyncpa %s7, 0
    %9 = vsyncpa [#allocation4], 0
    %s10 = scalar_lea.sflag [#allocation4], 1
    %11 = vsyncpa %s10, 0
    loop: start=0, step=1, limit=4
    $region2: #{tpu_custom_call.1} parent=1 // loop_pre_header
      _
    $region3: #{tpu_custom_call.1} parent=1 // loop_header
      %s13 = sphi 0, %s17
      %p14 = scmp.ge.s32.totalorder %s13, 4
      %s23 = sphi 0, %s25
      %s26 = sphi 0, %s23
      %s27 = sphi 0, %s26
      %s43 = sphi 0, %s27
      %s49 = sphi 0, %s51
      %s52 = sphi 0, %s49
      %s53 = sphi 0, %s52
      %s69 = sphi 0, %s53
    $region4: #{tpu_custom_call.1} parent=1 // loop_header_branch
      %16 = sbr.rel (%p14) target = $region8
    $region5: #{tpu_custom_call.1} parent=1 // loop_body
      %s18 = ssub.s32 %s13, 1
      %s19 = ssub.s32 %s13, 2
      %s20 = sadd.s32 %s13, 1
      %s21 = ssub.s32 %s13, %s20
      %p22 = scmp.eq.s32.totalorder %s21, 0
      %s24 = sadd.s32 %s23, 1
      %s25 = scalar_select %p22, %s23, %s24
      %p28 = pneg %p22
      %p29 = scmp.eq.s32.totalorder %s13, 1
      %p30 = por %p28, %p29
      %p31 = scmp.ne.s32.totalorder %s23, %s26
      %p32 = scmp.eq.s32.totalorder %s13, 0
      %p33 = por %p31, %p32
      %p34 = scmp.ne.s32.totalorder %s23, %s26
      %p35 = scmp.eq.s32.totalorder %s18, 1
      %p36 = por %p34, %p35
      %p37 = scmp.ne.s32.totalorder %s26, %s27
      %p38 = scmp.eq.s32.totalorder %s18, 0
      %p39 = por %p37, %p38
      %p40 = scmp.ne.s32.totalorder %s26, %s27
      %p41 = scmp.eq.s32.totalorder %s19, 1
      %p42 = por %p40, %p41
      %p44 = scmp.ne.s32.totalorder %s27, %s43
      %p45 = scmp.eq.s32.totalorder %s19, 0
      %p46 = por %p44, %p45
      %s47 = ssub.s32 %s13, %s20
      %p48 = scmp.eq.s32.totalorder %s47, 0
      %s50 = sadd.s32 %s49, 1
      %s51 = scalar_select %p48, %s49, %s50
      %p54 = pneg %p48
      %p55 = scmp.eq.s32.totalorder %s13, 1
      %p56 = por %p54, %p55
      %p57 = scmp.ne.s32.totalorder %s49, %s52
      %p58 = scmp.eq.s32.totalorder %s13, 0
      %p59 = por %p57, %p58
      %p60 = scmp.ne.s32.totalorder %s49, %s52
      %p61 = scmp.eq.s32.totalorder %s18, 1
      %p62 = por %p60, %p61
      %p63 = scmp.ne.s32.totalorder %s52, %s53
      %p64 = scmp.eq.s32.totalorder %s18, 0
      %p65 = por %p63, %p64
      %p66 = scmp.ne.s32.totalorder %s52, %s53
      %p67 = scmp.eq.s32.totalorder %s19, 1
      %p68 = por %p66, %p67
      %p70 = scmp.ne.s32.totalorder %s53, %s69
      %p71 = scmp.eq.s32.totalorder %s19, 0
      %p72 = por %p70, %p71
      %p73 = scmp.le.s32.totalorder 1, %s13
      %p74 = scmp.lt.s32.totalorder %s13, 3
      %p75 = pnand %p73, %p74
      %p76 = pneg %p75
      // Predicated region
      $region9: #{tpu_custom_call.1} parent=5 // pred_check
        _
      $region10: #{tpu_custom_call.1} parent=5 // pred_check_branch
        %78 = sbr.rel (%p75) target = $region12
      $region11: #{tpu_custom_call.1} parent=5 // pred_region
        %s79 = ssub.s32 %s13, 1
      $region12: #{tpu_custom_call.1} parent=5 // pred_fallthru
        _
      %p80 = scmp.lt.s32.totalorder %s13, 2
      // Predicated region
      $region13: #{tpu_custom_call.1} parent=5 // pred_check
        %p81 = pneg %p80
      $region14: #{tpu_custom_call.1} parent=5 // pred_check_branch
        %83 = sbr.rel (%p81) target = $region16
      $region15: #{tpu_custom_call.1} parent=5 // pred_region
        // Predicated region
        $region17: #{tpu_custom_call.1} parent=15 // pred_check
          %p84 = pneg %p33
        $region18: #{tpu_custom_call.1} parent=15 // pred_check_branch
          %86 = sbr.rel (%p84) target = $region20
        $region19: #{tpu_custom_call.1} parent=15 // pred_region
          %s87 = sand.u32 %s23, 1
          %s88 = scalar_lea.sflag [#allocation3], %s87
          %s89 = sand.u32 %s23, 1
          %s90 = smul.addr %s89, 32
          %s91 = scalar_lea.vmem [#allocation2], %s90
          %s93 = ssub.s32 512, 512
          %94 = vsyncadd %s88, %s93
          %s95 = smul.addr %s13, 4
          %s96 = smul.addr %s95, 128
          %s97 = scalar_lea.hbm %s0, %s96
          %s98 = sshll.u32 %s91, 4
          %s99 = int_to_ptr.vmem [resolvable:$true] %s98
          %104 = dma.hbm_to_vmem [thread:$0]  %s97, 512, %s99, %s88, 128, 128, 8
        $region20: #{tpu_custom_call.1} parent=15 // pred_fallthru
          _
      $region16: #{tpu_custom_call.1} parent=5 // pred_fallthru
        _
      %p105 = scmp.le.s32.totalorder 1, %s13
      %p106 = scmp.lt.s32.totalorder %s13, 3
      %p107 = pnand %p105, %p106
      %p108 = pneg %p107
      // Predicated region
      $region21: #{tpu_custom_call.1} parent=5 // pred_check
        _
      $region22: #{tpu_custom_call.1} parent=5 // pred_check_branch
        %110 = sbr.rel (%p107) target = $region24
      $region23: #{tpu_custom_call.1} parent=5 // pred_region
        %s111 = ssub.s32 %s13, 1
        %s112 = sand.u32 %s26, 1
        %s113 = scalar_lea.sflag [#allocation3], %s112
        %s114 = sand.u32 %s26, 1
        %s115 = smul.addr %s114, 32
        %s116 = scalar_lea.vmem [#allocation2], %s115
        // Predicated region
        $region25: #{tpu_custom_call.1} parent=23 // pred_check
          %p117 = pneg %p39
        $region26: #{tpu_custom_call.1} parent=23 // pred_check_branch
          %119 = sbr.rel (%p117) target = $region28
        $region27: #{tpu_custom_call.1} parent=23 // pred_region
          %120 = dma.done %s113, 512
        $region28: #{tpu_custom_call.1} parent=23 // pred_fallthru
          _
        %s121 = sand.u32 %s26, 1
        %s122 = scalar_lea.sflag [#allocation3], %s121
        %s123 = sand.u32 %s26, 1
        %s124 = smul.addr %s123, 32
        %s125 = scalar_lea.vmem [#allocation2], %s124
        %p126 = pneg %p39
        %p127 = pneg %p36
        %p128 = pneg %p65
        %p129 = pneg %p62
        %s130 = sand.u32 %s52, 1
        %s131 = scalar_lea.sflag [#allocation4], %s130
        %s132 = sand.u32 %s52, 1
        %s133 = smul.addr %s132, 64
        %s134 = scalar_lea.vmem [#allocation5], %s133
        %v135 = vld [vmem:[%s116] sm:$0xff]
        %v136 = vld [vmem:[%s116 + $0x8] sm:$0xff]
        %v137 = vld [vmem:[%s116 + $0x10] sm:$0xff]
        %v138 = vld [vmem:[%s116 + $0x18] sm:$0xff]
        %v139 = vlaneseq
        %v140 = vshrl.u32 %v139, 7
        %v141 = vadd.s32 %v140, 8
        %v142 = vadd.s32 %v140, 16
        %v143 = vadd.s32 %v140, 24
        %v144 = vlaneseq
        %v145 = vand.u32 %v144, 127
        %v146 = vmul.u32 %v145, 2
        %vm147 = vcmp.eq.s32.totalorder %v140, %v146
        %vm148 = vcmp.eq.s32.totalorder %v141, %v146
        %vm149 = vcmp.eq.s32.totalorder %v142, %v146
        %vm150 = vcmp.eq.s32.totalorder %v143, %v146
        %v151 = vsel %vm147, 1, 0
        %v152 = vsel %vm148, 1, 0
        %v153 = vsel %vm149, 1, 0
        %v154 = vsel %vm150, 1, 0
        %v155 = vcvt.s32.f32 %v151
        %v156 = vcvt.s32.f32 %v152
        %v157 = vcvt.s32.f32 %v153
        %v158 = vcvt.s32.f32 %v154
        %vm159 = vcmask 261120
        %v161 = vsel %vm159, %v135, 0
        %v164 = vsel %vm159, %v136, 0
        %v167 = vsel %vm159, %v137, 0
        %v170 = vsel %vm159, %v138, 0
        %172 = vmatprep.subr.mxu0 0.0
        %173 = vmatpush1.msra.mxu0 %v155
        %174 = vmatprep.subr.mxu0 0.0
        %175 = vmatpush1.msra.mxu0 %v156
        %176 = vmatprep.subr.mxu0 0.0
        %177 = vmatpush1.msra.mxu0 %v157
        %178 = vmatprep.subr.mxu0 0.0
        %179 = vmatpush1.msra.mxu0 %v158
        %180 = vmatprep.subr.mxu0 0.0
        %181 = vmatpush1.msra.mxu0 0.0
        %182 = vmatprep.subr.mxu0 0.0
        %183 = vmatpush1.msra.mxu0 0.0
        %184 = vmatprep.subr.mxu0 0.0
        %185 = vmatpush1.msra.mxu0 0.0
        %186 = vmatprep.subr.mxu0 0.0
        %187 = vmatpush1.msra.mxu0 0.0
        %188 = vmatprep.subr.mxu0 0.0
        %189 = vmatpush1.msra.mxu0 0.0
        %190 = vmatprep.subr.mxu0 0.0
        %191 = vmatpush1.msra.mxu0 0.0
        %192 = vmatprep.subr.mxu0 0.0
        %193 = vmatpush1.msra.mxu0 0.0
        %194 = vmatprep.subr.mxu0 0.0
        %195 = vmatpush1.msra.mxu0 0.0
        %196 = vmatprep.subr.mxu0 0.0
        %197 = vmatpush1.msra.mxu0 0.0
        %198 = vmatprep.subr.mxu0 0.0
        %199 = vmatpush1.msra.mxu0 0.0
        %200 = vmatprep.subr.mxu0 0.0
        %201 = vmatpush1.msra.mxu0 0.0
        %202 = vmatprep.subr.mxu0 0.0
        %203 = vmatpush1.msra.mxu0 0.0
        %204 = vmatprep.subr.mxu0 0.0
        %205 = vmatpush1.msra.mxu0 0.0
        %206 = vmatprep.subr.mxu0 0.0
        %207 = vmatpush1.msra.mxu0 0.0
        %208 = vmatprep.subr.mxu0 0.0
        %209 = vmatpush1.msra.mxu0 0.0
        %210 = vmatprep.subr.mxu0 0.0
        %211 = vmatpush1.msra.mxu0 0.0
        %212 = vmatprep.subr.mxu0 0.0
        %213 = vmatpush1.msra.mxu0 0.0
        %214 = vmatprep.subr.mxu0 0.0
        %215 = vmatpush1.msra.mxu0 0.0
        %216 = vmatprep.subr.mxu0 0.0
        %217 = vmatpush1.msra.mxu0 0.0
        %218 = vmatprep.subr.mxu0 0.0
        %219 = vmatpush1.msra.mxu0 0.0
        %220 = vmatprep.subr.mxu0 0.0
        %221 = vmatpush1.msra.mxu0 0.0
        %222 = vmatprep.subr.mxu0 0.0
        %223 = vmatpush1.msra.mxu0 0.0
        %224 = vmatprep.subr.mxu0 0.0
        %225 = vmatpush1.msra.mxu0 0.0
        %226 = vmatprep.subr.mxu0 0.0
        %227 = vmatpush1.msra.mxu0 0.0
        %228 = vmatprep.subr.mxu0 0.0
        %229 = vmatpush1.msra.mxu0 0.0
        %230 = vmatprep.subr.mxu0 0.0
        %231 = vmatpush1.msra.mxu0 0.0
        %232 = vmatprep.subr.mxu0 0.0
        %233 = vmatpush1.msra.mxu0 0.0
        %234 = vmatprep.subr.mxu0 0.0
        %235 = vmatpush1.msra.mxu0 0.0
        %236 = vmatprep.mubr.f32.mxu0 0.0
        %237 = vmatmul.mubr.f32.gmra.mrb[0].mxu0 %v161
        %v238 = vpop.f32.mrb[0].mxu0
        %v239 = vadd.f32 0.0, %v238
        %v240 = vpop.f32.mrb[0].mxu0
        %241 = vmatprep.mubr.f32.mxu0 0.0
        %242 = vmatmul.mubr.f32.gmra.mrb[0].mxu0 %v164
        %v243 = vpop.f32.mrb[0].mxu0
        %v244 = vadd.f32 0.0, %v243
        %v245 = vpop.f32.mrb[0].mxu0
        %246 = vmatprep.mubr.f32.mxu0 0.0
        %247 = vmatmul.mubr.f32.gmra.mrb[0].mxu0 %v167
        %v248 = vpop.f32.mrb[0].mxu0
        %v249 = vadd.f32 0.0, %v248
        %v250 = vpop.f32.mrb[0].mxu0
        %251 = vmatprep.mubr.f32.mxu0 0.0
        %252 = vmatmul.mubr.f32.gmra.mrb[0].mxu0 %v170
        %v253 = vpop.f32.mrb[0].mxu0
        %v254 = vadd.f32 0.0, %v253
        %v255 = vpop.f32.mrb[0].mxu0
        %256 = vdwg.mxu0
        %s257 = scalar_lea.vmem %s134, 16 [#allocation5]
        %vm258 = vcmask 64512
        %259 = vst.msk [vmem:[%s257] sm:$0xff] %vm258, %v239
        %260 = vst.msk [vmem:[%s257 + $0x8] sm:$0xff] %vm258, %v244
        %261 = vst.msk [vmem:[%s257 + $0x10] sm:$0xff] %vm258, %v249
        %262 = vst.msk [vmem:[%s257 + $0x18] sm:$0xff] %vm258, %v254
        %263 = vst.msk [vmem:[%s134] sm:$0xff] %vm258, 0.0
        %264 = vst.msk [vmem:[%s134 + $0x8] sm:$0xff] %vm258, 0.0
        %s265 = scalar_lea.vmem %s134, 48 [#allocation5]
        %266 = vst.msk [vmem:[%s265] sm:$0xff] %vm258, 0.0
        %267 = vst.msk [vmem:[%s265 + $0x8] sm:$0xff] %vm258, 0.0
        %s268 = sand.u32 %s52, 1
        %s269 = scalar_lea.sflag [#allocation4], %s268
        %s270 = sand.u32 %s52, 1
        %s271 = smul.addr %s270, 64
        %s272 = scalar_lea.vmem [#allocation5], %s271
        // Predicated region
        $region29: #{tpu_custom_call.1} parent=23 // pred_check
          %p273 = pneg %p62
        $region30: #{tpu_custom_call.1} parent=23 // pred_check_branch
          %275 = sbr.rel (%p273) target = $region32
        $region31: #{tpu_custom_call.1} parent=23 // pred_region
          %s277 = ssub.s32 1024, 1024
          %278 = vsyncadd %s269, %s277
          %s279 = smul.addr %s18, 8
          %s280 = smul.addr %s279, 128
          %s281 = scalar_lea.hbm %s1, %s280
          %s282 = sshll.u32 %s272, 4
          %s283 = int_to_ptr.vmem [resolvable:$true] %s282
          %288 = dma.vmem_to_hbm [thread:$0]  %s283, 1024, %s281, %s269, 128, 128, 8
        $region32: #{tpu_custom_call.1} parent=23 // pred_fallthru
          _
      $region24: #{tpu_custom_call.1} parent=5 // pred_fallthru
        _
      %p289 = scmp.le.s32.totalorder 2, %s13
      // Predicated region
      $region33: #{tpu_custom_call.1} parent=5 // pred_check
        %p290 = pneg %p289
      $region34: #{tpu_custom_call.1} parent=5 // pred_check_branch
        %292 = sbr.rel (%p290) target = $region36
      $region35: #{tpu_custom_call.1} parent=5 // pred_region
        %s293 = ssub.s32 %s13, 2
        // Predicated region
        $region37: #{tpu_custom_call.1} parent=35 // pred_check
          %p294 = pneg %p68
        $region38: #{tpu_custom_call.1} parent=35 // pred_check_branch
          %296 = sbr.rel (%p294) target = $region40
        $region39: #{tpu_custom_call.1} parent=35 // pred_region
          %s297 = sand.u32 %s53, 1
          %s298 = scalar_lea.sflag [#allocation4], %s297
          %s299 = sand.u32 %s53, 1
          %s300 = smul.addr %s299, 64
          %s301 = scalar_lea.vmem [#allocation5], %s300
          %302 = dma.done %s298, 1024
        $region40: #{tpu_custom_call.1} parent=35 // pred_fallthru
          _
      $region36: #{tpu_custom_call.1} parent=5 // pred_fallthru
        _
    $region6: #{tpu_custom_call.1} parent=1 // loop_footer
      %s17 = sadd.s32 1, %s13
    $region7: #{tpu_custom_call.1} parent=1 // loop_footer_branch
      %12 = sbr.rel target = $region3
    $region8: #{tpu_custom_call.1} parent=1 // loop_exit
      _
    %303 = vsyncpa [#allocation3], 1
    %s304 = scalar_lea.sflag [#allocation3], 1
    %305 = vsyncpa %s304, 1
    %306 = vsyncpa [#allocation4], 1
    %s307 = scalar_lea.sflag [#allocation4], 1
    %308 = vsyncpa %s307, 1

</llo_original>
